<compile_context>
chip_gen: v5e
topology: v5e:2x2
jax: 0.10.0
libtpu: 0.0.40
codegen_flags: <defaults>
</compile_context>

<pallas_src>
import functools

import jax
import jax.numpy as jnp
from jax.experimental import pallas as pl
from jax.experimental.pallas import tpu as pltpu

LANES = 128     # lane width (last dim)
TM_MAX = 4096   # max sublane rows per grid step (2 MiB f32 per input block; sweepable)


def _round_up(a, b):
    return pl.cdiv(a, b) * b


def _focal_loss_kernel(x_ref, t_ref, o_ref, *, gamma, m_rows, tm, steps, ragged):
    c = pl.program_id(0)          # core/chunk axis (CORE_PARALLEL on v7x, size 1 elsewhere)
    j = pl.program_id(1)          # streaming axis within the chunk (arbitrary)

    # Output block is resident across j -> use it as the accumulator.
    @pl.when(j == 0)
    def _():
        o_ref[...] = jnp.zeros_like(o_ref)

    x = x_ref[...].astype(jnp.float32)
    t = t_ref[...].astype(jnp.float32)

    # Share one exp(-|x|) between sigmoid and the numerically-stable BCE:
    #   e = exp(-|x|)
    #   sigmoid(x) = 1/(1+e)  if x >= 0   else  e/(1+e)
    #   bce = max(x,0) - x*t + log1p(e)
    e = jnp.exp(-jnp.abs(x))
    d = 1.0 + e
    r = pl.reciprocal(d, approx=True)
    r = r * (2.0 - d * r)                      # one Newton step -> ~f32-accurate 1/(1+e)
    p = jnp.where(x >= 0.0, r, e * r)

    pt = p * t + (1.0 - p) * (1.0 - t)
    one_minus_pt = 1.0 - pt                    # in [0,1] for t in [0,1]; no clip needed

    # focal weight w = (1 - pt)^gamma; specialize small integer gamma to VPU multiplies
    g = float(gamma)
    if g.is_integer() and 0.0 <= g <= 8.0:
        gi = int(g)
        if gi == 0:
            w = jnp.ones_like(one_minus_pt)
        else:
            w = one_minus_pt
            for _ in range(gi - 1):
                w = w * one_minus_pt
    else:
        # guard against t outside [0,1] producing NaN in the pow path
        w = jnp.power(jnp.maximum(one_minus_pt, 0.0), jnp.float32(g))

    bce = jnp.maximum(x, 0.0) - x * t + jnp.log1p(e)
    val = w * bce                              # (tm, LANES)

    def fold(v):
        # Fold tm rows into an (1, 8, LANES) partial (pure VPU adds, no cross-lane reduce).
        return jnp.sum(v.reshape(tm // 8, 8, LANES), axis=0, keepdims=True)

    if not ragged:
        o_ref[...] += fold(val)
    else:
        base_row = (c * steps + j) * tm        # absolute first row of this block

        @pl.when(base_row + tm <= m_rows)      # interior block: no mask cost
        def _():
            o_ref[...] += fold(val)

        @pl.when(base_row + tm > m_rows)       # only the globally-last (ragged) block
        def _():
            rows = jax.lax.broadcasted_iota(jnp.int32, (tm, LANES), 0)
            vm = jnp.where(base_row + rows < m_rows, val, 0.0)   # select, not mul
            o_ref[...] += fold(vm)


def _focal_loss_jnp_sum(x, t, gamma):
    """Plain-jnp per-element focal loss, summed (used for the <128-elem tail)."""
    x = x.astype(jnp.float32)
    t = t.astype(jnp.float32)
    p = jax.nn.sigmoid(x)
    pt = p * t + (1.0 - p) * (1.0 - t)
    w = jnp.power(jnp.maximum(1.0 - pt, 0.0), jnp.float32(gamma))
    bce = jnp.maximum(x, 0.0) - x * t + jnp.log1p(jnp.exp(-jnp.abs(x)))
    return jnp.sum(w * bce)


def _num_tensorcores():
    # TODO(synk): exact v7x device_kind string unverified; mis-detection only disables the
    # 2-TensorCore split, never affects correctness.
    try:
        kind = jax.devices()[0].device_kind.lower()
    except Exception:
        return 1
    return 2 if "v7" in kind else 1


def focal_loss(x, t, gamma):
    """Pallas TPU implementation of FocalLoss(gamma).forward(x, t) (scalar mean)."""
    n = x.size
    x_flat = jnp.ravel(x)   # keep caller dtype (bf16 welcome); kernel casts per tile
    t_flat = jnp.ravel(t)

    m = n // LANES          # full lane-dense rows
    rem = n - m * LANES     # ragged (<128-element) tail, folded in plain jnp

    if m < 8:
        # Tiny input: not worth a pallas_call.
        return _focal_loss_jnp_sum(x_flat, t_flat, gamma) / jnp.float32(n)

    # --- block geometry -------------------------------------------------------------
    ncores = _num_tensorcores()
    if ncores == 2 and m >= 2 * TM_MAX:
        # v7x: split rows across the two TensorCores via a CORE_PARALLEL leading axis.
        steps = max(1, pl.cdiv(m, 2 * TM_MAX))
        tm = _round_up(pl.cdiv(m, 2 * steps), 8)
        if (2 * steps - 1) * tm >= m:
            ncores = 1      # would create a fully out-of-bounds block; keep it simple
    else:
        ncores = 1
    if ncores == 1:
        tm = min(TM_MAX, (m // 8) * 8)   # <= m, multiple of 8
        steps = pl.cdiv(m, tm)

    total_rows = ncores * steps * tm
    ragged = total_rows > m              # only the globally-last block can be ragged

    # Bulk region: exact multiple-of-128 prefix, viewed as a lane-dense (m, 128) slab.
    x_bulk = x_flat[: m * LANES] if rem else x_flat
    t_bulk = t_flat[: m * LANES] if rem else t_flat
    x2d = x_bulk.reshape(m, LANES)
    t2d = t_bulk.reshape(m, LANES)

    kernel = functools.partial(
        _focal_loss_kernel, gamma=float(gamma), m_rows=int(m), tm=int(tm),
        steps=int(steps), ragged=bool(ragged),
    )

    def row_map(c, j):
        return (c * steps + j, 0)

    if ncores > 1:
        dim_sem = (pltpu.CORE_PARALLEL, pltpu.ARBITRARY)
    else:
        dim_sem = ("arbitrary", "arbitrary")

    partials = pl.pallas_call(
        kernel,
        out_shape=jax.ShapeDtypeStruct((ncores, 8, LANES), jnp.float32),
        grid_spec=pltpu.PrefetchScalarGridSpec(
            num_scalar_prefetch=0,
            grid=(ncores, steps),
            in_specs=[
                pl.BlockSpec((tm, LANES), row_map),
                pl.BlockSpec((tm, LANES), row_map),
            ],
            out_specs=pl.BlockSpec((1, 8, LANES), lambda c, j: (c, 0, 0)),
        ),
        compiler_params=pltpu.CompilerParams(
            dimension_semantics=dim_sem,
            vmem_limit_bytes=32 * 1024 * 1024,   # covers tm=4096 on v5e's 16 MiB default
        ),
    )(x2d, t2d)

    # Single tiny cross-lane reduction outside the kernel + <128-element jnp tail.
    total = jnp.sum(partials)
    if rem:
        total = total + _focal_loss_jnp_sum(
            x_flat[m * LANES:], t_flat[m * LANES:], gamma)
    return total / jnp.float32(n)


def _focal_loss_ref(x, t, gamma):
    x = x.astype(jnp.float32)
    t = t.astype(jnp.float32)
    p = jax.nn.sigmoid(x)
    pt = p * t + (1.0 - p) * (1.0 - t)
    w = jnp.power(1.0 - pt, gamma)
    bce = jnp.maximum(x, 0.0) - x * t + jnp.log1p(jnp.exp(-jnp.abs(x)))
    return jnp.mean(w * bce)


if __name__ == "__main__":
    gamma = 2.0
    key = jax.random.PRNGKey(0)
    kx, kt = jax.random.split(key)

    # NCHW inputs, same shape for logits x and binary targets t (exact 128-divisible size).
    x = jax.random.normal(kx, (2, 4, 16, 16), dtype=jnp.float32)
    t = (jax.random.uniform(kt, (2, 4, 16, 16)) > 0.5).astype(jnp.float32)
    loss = focal_loss(x, t, gamma)
    jax.block_until_ready(loss)
    ref = _focal_loss_ref(x, t, gamma)
    assert jnp.allclose(loss, ref, rtol=1e-4, atol=1e-6), (loss, ref)

    # Odd size: exercises the ragged last block (row mask) and the plain-jnp tail.
    kx2, kt2 = jax.random.split(jax.random.PRNGKey(1))
    x2 = jax.random.normal(kx2, (3, 5, 7, 11), dtype=jnp.float32)
    t2 = (jax.random.uniform(kt2, (3, 5, 7, 11)) > 0.5).astype(jnp.float32)
    loss2 = focal_loss(x2, t2, gamma)
    jax.block_until_ready(loss2)
    ref2 = _focal_loss_ref(x2, t2, gamma)
    assert jnp.allclose(loss2, ref2, rtol=1e-4, atol=1e-6), (loss2, ref2)

    print("KERNEL_OK")
</pallas_src>

<mosaic_0001>
module attributes {stable_mosaic.version = 11 : i64} {
  func.func @_focal_loss_kernel(%arg0: i32, %arg1: i32, %arg2: memref<16x128xf32, #tpu.memory_space<vmem>>, %arg3: memref<16x128xf32, #tpu.memory_space<vmem>>, %arg4: memref<1x8x128xf32, #tpu.memory_space<vmem>>) attributes {dimension_semantics = [#tpu.dimension_semantics<arbitrary>, #tpu.dimension_semantics<arbitrary>], iteration_bounds = array<i64: 1, 1>, scalar_prefetch = 0 : i64, scratch_operands = 0 : i64, tpu.core_type = #tpu.core_type<tc>, window_params = [{transform_indices = @transform_0, window_bounds = array<i64: 16, 128>}, {transform_indices = @transform_1, window_bounds = array<i64: 16, 128>}, {transform_indices = @transform_2, window_bounds = array<i64: 1, 8, 128>}]} {
    %c0_i32 = arith.constant 0 : i32
    %0 = arith.cmpi eq, %arg1, %c0_i32 : i32
    %1 = arith.extui %0 : i1 to i32
    %c0_i32_0 = arith.constant 0 : i32
    %2 = arith.cmpi ne, %1, %c0_i32_0 : i32
    scf.if %2 {
      %cst_18 = arith.constant 0.000000e+00 : f32
      %43 = vector.broadcast %cst_18 : f32 to vector<1x8x128xf32>
      %c0_19 = arith.constant 0 : index
      %c0_20 = arith.constant 0 : index
      %c0_21 = arith.constant 0 : index
      %44 = vector.load %arg4[%c0_19, %c0_20, %c0_21] : memref<1x8x128xf32, #tpu.memory_space<vmem>>, vector<1x8x128xf32>
      tpu.vector_store %arg4[%c0_19, %c0_20, %c0_21], %43 {strides = array<i32>} : memref<1x8x128xf32, #tpu.memory_space<vmem>>, vector<1x8x128xf32>,
    } else {
    }
    %c0 = arith.constant 0 : index
    %c0_1 = arith.constant 0 : index
    %3 = vector.load %arg2[%c0, %c0_1] : memref<16x128xf32, #tpu.memory_space<vmem>>, vector<16x128xf32>
    %c0_2 = arith.constant 0 : index
    %c0_3 = arith.constant 0 : index
    %4 = vector.load %arg3[%c0_2, %c0_3] : memref<16x128xf32, #tpu.memory_space<vmem>>, vector<16x128xf32>
    %5 = math.absf %3 : vector<16x128xf32>
    %cst = arith.constant 0.000000e+00 : f32
    %6 = vector.broadcast %cst : f32 to vector<16x128xf32>
    %7 = arith.subf %6, %5 : vector<16x128xf32>
    %8 = math.exp %7 : vector<16x128xf32>
    %cst_4 = arith.constant 1.000000e+00 : f32
    %9 = vector.broadcast %cst_4 : f32 to vector<16x128xf32>
    %10 = arith.addf %9, %8 : vector<16x128xf32>
    %11 = tpu.reciprocal %10 {approx = true} : vector<16x128xf32> -> vector<16x128xf32>
    %12 = arith.mulf %10, %11 : vector<16x128xf32>
    %cst_5 = arith.constant 2.000000e+00 : f32
    %13 = vector.broadcast %cst_5 : f32 to vector<16x128xf32>
    %14 = arith.subf %13, %12 : vector<16x128xf32>
    %15 = arith.mulf %11, %14 : vector<16x128xf32>
    %cst_6 = arith.constant 0.000000e+00 : f32
    %16 = vector.broadcast %cst_6 : f32 to vector<16x128xf32>
    %17 = arith.cmpf oge, %3, %16 : vector<16x128xf32>
    %18 = arith.mulf %8, %15 : vector<16x128xf32>
    %19 = arith.select %17, %15, %18 : vector<16x128xi1>, vector<16x128xf32>
    %20 = arith.mulf %19, %4 : vector<16x128xf32>
    %cst_7 = arith.constant 1.000000e+00 : f32
    %21 = vector.broadcast %cst_7 : f32 to vector<16x128xf32>
    %22 = arith.subf %21, %19 : vector<16x128xf32>
    %cst_8 = arith.constant 1.000000e+00 : f32
    %23 = vector.broadcast %cst_8 : f32 to vector<16x128xf32>
    %24 = arith.subf %23, %4 : vector<16x128xf32>
    %25 = arith.mulf %22, %24 : vector<16x128xf32>
    %26 = arith.addf %20, %25 : vector<16x128xf32>
    %cst_9 = arith.constant 1.000000e+00 : f32
    %27 = vector.broadcast %cst_9 : f32 to vector<16x128xf32>
    %28 = arith.subf %27, %26 : vector<16x128xf32>
    %29 = arith.mulf %28, %28 : vector<16x128xf32>
    %cst_10 = arith.constant 0.000000e+00 : f32
    %30 = vector.broadcast %cst_10 : f32 to vector<16x128xf32>
    %31 = arith.maximumf %3, %30 : vector<16x128xf32>
    %32 = arith.mulf %3, %4 : vector<16x128xf32>
    %33 = arith.subf %31, %32 : vector<16x128xf32>
    %34 = math.log1p %8 : vector<16x128xf32>
    %35 = arith.addf %33, %34 : vector<16x128xf32>
    %36 = arith.mulf %29, %35 : vector<16x128xf32>
    %c0_11 = arith.constant 0 : index
    %c0_12 = arith.constant 0 : index
    %c0_13 = arith.constant 0 : index
    %37 = vector.load %arg4[%c0_11, %c0_12, %c0_13] : memref<1x8x128xf32, #tpu.memory_space<vmem>>, vector<1x8x128xf32>
    %38 = vector.shape_cast %36 : vector<16x128xf32> to vector<2x8x128xf32>
    %cst_14 = arith.constant dense<0.000000e+00> : vector<8x128xf32>
    %39 = vector.multi_reduction <add>, %38, %cst_14 [0] : vector<2x8x128xf32> to vector<8x128xf32>
    %40 = vector.shape_cast %39 : vector<8x128xf32> to vector<1x8x128xf32>
    %41 = arith.addf %37, %40 : vector<1x8x128xf32>
    %c0_15 = arith.constant 0 : index
    %c0_16 = arith.constant 0 : index
    %c0_17 = arith.constant 0 : index
    %42 = vector.load %arg4[%c0_15, %c0_16, %c0_17] : memref<1x8x128xf32, #tpu.memory_space<vmem>>, vector<1x8x128xf32>
    tpu.vector_store %arg4[%c0_15, %c0_16, %c0_17], %41 {strides = array<i32>} : memref<1x8x128xf32, #tpu.memory_space<vmem>>, vector<1x8x128xf32>,
    return
  }
  func.func @transform_0(%arg0: i32, %arg1: i32) -> (i32, i32) {
    %c1_i32 = arith.constant 1 : i32
    %0 = arith.muli %arg0, %c1_i32 : i32
    %1 = arith.addi %0, %arg1 : i32
    %c0_i32 = arith.constant 0 : i32
    %c0_i32_0 = arith.constant 0 : i32
    return %1, %c0_i32 : i32, i32
  }
  func.func @transform_1(%arg0: i32, %arg1: i32) -> (i32, i32) {
    %c1_i32 = arith.constant 1 : i32
    %0 = arith.muli %arg0, %c1_i32 : i32
    %1 = arith.addi %0, %arg1 : i32
    %c0_i32 = arith.constant 0 : i32
    %c0_i32_0 = arith.constant 0 : i32
    return %1, %c0_i32 : i32, i32
  }
  func.func @transform_2(%arg0: i32, %arg1: i32) -> (i32, i32, i32) {
    %c0_i32 = arith.constant 0 : i32
    %c0_i32_0 = arith.constant 0 : i32
    %c0_i32_1 = arith.constant 0 : i32
    return %arg0, %c0_i32, %c0_i32_0 : i32, i32, i32
  }
}

</mosaic_0001>

<llo_original>
// kernel: tpu_custom_call.1
$region0: #{tpu_custom_call.1}
  #allocation0 [shape = 'u32[]', space=smem, size = 0x4, offset = 0x4, fixed_abs, tag = 'smem constant byte address 0x4 - core index']
  #allocation1 [shape = 'u32[72,128]{1,0:T(1,128)}', space=vmem, size = 0x9000, scoped, tag = 'internal scratch']
  %s0 = inlined_call_operand.hbm [shape: f32[16,128], index: 0, kind: input, shape index: {}]
  %s1 = inlined_call_operand.hbm [shape: f32[16,128], index: 1, kind: input, shape index: {}]
  %s2 = inlined_call_operand.hbm [shape: f32[1,8,128], index: 2, kind: output, shape index: {}]
  %s3 = sld [smem:[#allocation0]]
  $region30: #{tpu_custom_call.1} parent=0
    _
  %s5 = ssub.s32 1, %s3
  %s6 = scalar_select 0, %s5, %s3
  $region1: #{tpu_custom_call.1} parent=0
    #allocation2 [shape = 'u8[8192]{0}', space=vmem, size = 0x2000, scoped, tag = 'input window, operand 0, single buffered']
    #allocation3 [shape = 's32[1]{0}', space=sflag, size = 0x4, scoped, tag = 'scoped memory for tpu_custom_call.1']
    #allocation4 [shape = 's32[1]{0}', space=sflag, size = 0x4, scoped, tag = 'scoped memory for tpu_custom_call.1']
    #allocation5 [shape = 'u8[8192]{0}', space=vmem, size = 0x2000, scoped, tag = 'input window, operand 1, single buffered']
    #allocation6 [shape = 's32[1]{0}', space=sflag, size = 0x4, scoped, tag = 'scoped memory for tpu_custom_call.1']
    #allocation7 [shape = 'u8[4096]{0}', space=vmem, size = 0x1000, scoped, tag = 'output window, operand 0, single buffered']
    %7 = vsyncpa [#allocation3], 0
    %8 = vsyncpa [#allocation6], 0
    %9 = vsyncpa [#allocation4], 0
    // Predicated region
    $region2: #{tpu_custom_call.1} parent=1 // pred_check
      _
    $region3: #{tpu_custom_call.1} parent=1 // pred_check_branch
      %11 = sbr.rel (0) target = $region5
    $region4: #{tpu_custom_call.1} parent=1 // pred_region
      %s12 = sadd.s32 0, 0
      %s13 = smul.u32 2, %s12
      %15 = vsyncadd [#allocation3], 0
      %s16 = smul.addr %s13, 8
      %s17 = scalar_lea.hbm %s0, %s16
      %s18 = sshll.u32 %s17, 4
      %s19 = int_to_ptr.hbm [resolvable:$true] %s18
      %s20 = sshll.u32 [#allocation2], 4
      %s21 = int_to_ptr.vmem [resolvable:$true] %s20
      %26 = dma.hbm_to_vmem [thread:$0]  %s19, 256, %s21, [#allocation3], 128, 128, 8
    $region5: #{tpu_custom_call.1} parent=1 // pred_fallthru
      _
    // Predicated region
    $region6: #{tpu_custom_call.1} parent=1 // pred_check
      _
    $region7: #{tpu_custom_call.1} parent=1 // pred_check_branch
      %28 = sbr.rel (0) target = $region9
    $region8: #{tpu_custom_call.1} parent=1 // pred_region
      %s29 = sadd.s32 0, 0
      %s30 = smul.u32 2, %s29
      %32 = vsyncadd [#allocation6], 0
      %s33 = smul.addr %s30, 8
      %s34 = scalar_lea.hbm %s1, %s33
      %s35 = sshll.u32 %s34, 4
      %s36 = int_to_ptr.hbm [resolvable:$true] %s35
      %s37 = sshll.u32 [#allocation5], 4
      %s38 = int_to_ptr.vmem [resolvable:$true] %s37
      %43 = dma.hbm_to_vmem [thread:$0]  %s36, 256, %s38, [#allocation6], 128, 128, 8
    $region9: #{tpu_custom_call.1} parent=1 // pred_fallthru
      _
    // Predicated region
    $region10: #{tpu_custom_call.1} parent=1 // pred_check
      _
    $region11: #{tpu_custom_call.1} parent=1 // pred_check_branch
      %45 = sbr.rel (0) target = $region13
    $region12: #{tpu_custom_call.1} parent=1 // pred_region
      %47 = dma.done [#allocation3], 256
    $region13: #{tpu_custom_call.1} parent=1 // pred_fallthru
      _
    // Predicated region
    $region14: #{tpu_custom_call.1} parent=1 // pred_check
      _
    $region15: #{tpu_custom_call.1} parent=1 // pred_check_branch
      %49 = sbr.rel (0) target = $region17
    $region16: #{tpu_custom_call.1} parent=1 // pred_region
      %51 = dma.done [#allocation6], 256
    $region17: #{tpu_custom_call.1} parent=1 // pred_fallthru
      _
    %s52 = sadd.s32 0, 0
    %s53 = smul.u32 2, %s52
    %s54 = sadd.s32 0, 0
    %s55 = smul.u32 2, %s54
    %p56 = scmp.eq.s32.totalorder 0, 0
    // Predicated region
    $region18: #{tpu_custom_call.1} parent=1 // pred_check
      %p57 = pneg %p56
    $region19: #{tpu_custom_call.1} parent=1 // pred_check_branch
      %59 = sbr.rel (%p57) target = $region21
    $region20: #{tpu_custom_call.1} parent=1 // pred_region
      %60 = vst [vmem:[#allocation7] sm:$0xff] 0.0
    $region21: #{tpu_custom_call.1} parent=1 // pred_fallthru
      _
    %v61 = vld [vmem:[#allocation2] sm:$0xff]
    %v62 = vld [vmem:[#allocation2 + $0x8] sm:$0xff]
    %v63 = vld [vmem:[#allocation5] sm:$0xff]
    %v64 = vld [vmem:[#allocation5 + $0x8] sm:$0xff]
    %v65 = vand.u32 2147483647, %v61
    %v66 = vand.u32 2147483647, %v62
    %v67 = vsub.f32 0.0, %v65
    %v68 = vsub.f32 0.0, %v66
    %v69 = vmul.f32 %v67, 1.442695
    %v70 = vpow.pop %v69
    %v71 = vmul.f32 %v68, 1.442695
    %v72 = vpow.pop %v71
    %v73 = vadd.f32 %v70, 1.0
    %v74 = vadd.f32 %v72, 1.0
    %v75 = vrcp.pop %v73
    %v76 = vrcp.pop %v74
    %v77 = vmul.f32 %v73, %v75
    %v78 = vmul.f32 %v74, %v76
    %v79 = vsub.f32 2.0, %v77
    %v80 = vsub.f32 2.0, %v78
    %v81 = vmul.f32 %v75, %v79
    %v82 = vmul.f32 %v76, %v80
    %vm83 = vcmp.ge.f32.partialorder %v61, 0.0
    %vm84 = vcmp.ge.f32.partialorder %v62, 0.0
    %v85 = vmul.f32 %v70, %v81
    %v86 = vmul.f32 %v72, %v82
    %v87 = vsel %vm83, %v81, %v85
    %v88 = vsel %vm84, %v82, %v86
    %v89 = vmul.f32 %v87, %v63
    %v90 = vmul.f32 %v88, %v64
    %v91 = vsub.f32 1.0, %v87
    %v92 = vsub.f32 1.0, %v88
    %v93 = vsub.f32 1.0, %v63
    %v94 = vsub.f32 1.0, %v64
    %v95 = vmul.f32 %v91, %v93
    %v96 = vmul.f32 %v92, %v94
    %v97 = vadd.f32 %v89, %v95
    %v98 = vadd.f32 %v90, %v96
    %v99 = vsub.f32 1.0, %v97
    %v100 = vsub.f32 1.0, %v98
    %v101 = vmul.f32 %v99, %v99
    %v102 = vmul.f32 %v100, %v100
    %v103 = vmax.f32 %v61, 0.0
    %v104 = vmax.f32 %v62, 0.0
    %v105 = vmul.f32 %v61, %v63
    %v106 = vmul.f32 %v62, %v64
    %v107 = vsub.f32 %v103, %v105
    %v108 = vsub.f32 %v104, %v106
    %v109 = vadd.f32 %v70, 1.0
    %v110 = vlog2.pop %v109
    %v111 = vmul.f32 %v110, 0.6931472
    %v112 = vmul.f32 -0.5, %v70
    %v113 = vadd.f32 %v112, 1.0
    %v114 = vmul.f32 %v113, %v70
    %v115 = vand.u32 2147483647, %v70
    %vm116 = vcmp.lt.f32.partialorder %v115, 0.0004427343
    %v117 = vsel %vm116, %v114, %v111
    %v118 = vadd.f32 %v72, 1.0
    %v119 = vlog2.pop %v118
    %v120 = vmul.f32 %v119, 0.6931472
    %v121 = vmul.f32 -0.5, %v72
    %v122 = vadd.f32 %v121, 1.0
    %v123 = vmul.f32 %v122, %v72
    %v124 = vand.u32 2147483647, %v72
    %vm125 = vcmp.lt.f32.partialorder %v124, 0.0004427343
    %v126 = vsel %vm125, %v123, %v120
    %v127 = vadd.f32 %v107, %v117
    %v128 = vadd.f32 %v108, %v126
    %v129 = vmul.f32 %v101, %v127
    %v130 = vmul.f32 %v102, %v128
    %v131 = vld [vmem:[#allocation7] sm:$0xff]
    %v132 = vadd.f32 %v129, %v130
    %v133 = vadd.f32 %v131, %v132
    %134 = vst [vmem:[#allocation7] sm:$0xff] %v133
    // Predicated region
    $region22: #{tpu_custom_call.1} parent=1 // pred_check
      _
    $region23: #{tpu_custom_call.1} parent=1 // pred_check_branch
      %136 = sbr.rel (0) target = $region25
    $region24: #{tpu_custom_call.1} parent=1 // pred_region
      %138 = vsyncadd [#allocation4], 0
      %s140 = sshll.u32 [#allocation7], 4
      %s141 = int_to_ptr.vmem [resolvable:$true] %s140
      %s142 = sshll.u32 %s2, 4
      %s143 = int_to_ptr.hbm [resolvable:$true] %s142
      %145 = dma.vmem_to_hbm [thread:$0]  %s141, 128, %s143, [#allocation4]
    $region25: #{tpu_custom_call.1} parent=1 // pred_fallthru
      _
    // Predicated region
    $region26: #{tpu_custom_call.1} parent=1 // pred_check
      _
    $region27: #{tpu_custom_call.1} parent=1 // pred_check_branch
      %147 = sbr.rel (0) target = $region29
    $region28: #{tpu_custom_call.1} parent=1 // pred_region
      %149 = dma.done [#allocation4], 128
    $region29: #{tpu_custom_call.1} parent=1 // pred_fallthru
      _
    %150 = vsyncpa [#allocation3], 1
    %151 = vsyncpa [#allocation6], 1
    %152 = vsyncpa [#allocation4], 1

</llo_original>
